<compile_context>
chip_gen: v7x
topology: tpu7x:2x2x1
jax: 0.10.0
libtpu: 0.0.40
codegen_flags: <defaults>
</compile_context>

<pallas_src>
import functools

import jax
import jax.numpy as jnp
from jax.experimental import pallas as pl
from jax.experimental.pallas import tpu as pltpu


def _round_up(x: int, m: int) -> int:
    return ((x + m - 1) // m) * m


def _gcn_fused_kernel(adj_ref, x_ref, w1_ref, b1_ref, w2_ref, b2_ref, out_ref):
    """Fused two-layer GCN on the full (VMEM-resident) graph.

    adj_ref : [N, N]            normalized adjacency (MXU dtype, e.g. bf16)
    x_ref   : [N, F_in]         input features       (MXU dtype)
    w1_ref  : [F_in, HID_P]     layer-1 weight, lane-padded (MXU dtype)
    b1_ref  : [1, HID_P]        layer-1 bias (f32)
    w2_ref  : [HID_P, OUT_P]    layer-2 weight, lane-padded (MXU dtype)
    b2_ref  : [1, OUT_P]        layer-2 bias (f32)
    out_ref : [N, OUT_P]        output (f32), padded columns are exactly zero
    """
    mxu_dtype = adj_ref.dtype

    # ---- Layer 1: (A @ X) @ W1  (F_in < HID -> contract adjacency against narrower X) ----
    agg1 = jnp.dot(adj_ref[...], x_ref[...], preferred_element_type=jnp.float32)
    h1 = jnp.dot(agg1.astype(mxu_dtype), w1_ref[...], preferred_element_type=jnp.float32)
    h1 = jnp.maximum(h1 + b1_ref[...], 0.0)          # f32 epilogue (bias + relu)

    # Dropout(0.3) between layers -> identity in eval mode.

    # ---- Layer 2: A @ (h1 @ W2)  (OUT < HID -> contract adjacency against narrower h1@W2) ----
    xw2 = jnp.dot(h1.astype(mxu_dtype), w2_ref[...], preferred_element_type=jnp.float32)
    out = jnp.dot(adj_ref[...], xw2.astype(mxu_dtype), preferred_element_type=jnp.float32)
    out_ref[...] = (out + b2_ref[...]).astype(out_ref.dtype)


def gcn_forward(adj, x, params, *, mxu_dtype=jnp.bfloat16, lane: int = 128):
    """Fused two-layer GCN forward (eval mode). Returns [N, out_size] float32."""
    n, f_in = x.shape
    hid = params["w1"].shape[1]
    out_size = params["w2"].shape[1]

    hid_p = _round_up(max(hid, lane), lane)
    out_p = _round_up(max(out_size, lane), lane)

    # Lane-pad weights / biases with zeros (padded hidden/output columns stay exactly 0).
    w1p = jnp.zeros((f_in, hid_p), mxu_dtype).at[:, :hid].set(params["w1"].astype(mxu_dtype))
    b1p = jnp.zeros((1, hid_p), jnp.float32).at[:, :hid].set(
        params["b1"].astype(jnp.float32).reshape(1, hid))
    w2p = jnp.zeros((hid_p, out_p), mxu_dtype).at[:hid, :out_size].set(
        params["w2"].astype(mxu_dtype))
    b2p = jnp.zeros((1, out_p), jnp.float32).at[:, :out_size].set(
        params["b2"].astype(jnp.float32).reshape(1, out_size))

    # bf16 MXU inputs: halves HBM traffic for the N x N adjacency (dominant bytes).
    adj_m = adj.astype(mxu_dtype)
    x_m = x.astype(mxu_dtype)

    out_padded = pl.pallas_call(
        _gcn_fused_kernel,
        out_shape=jax.ShapeDtypeStruct((n, out_p), jnp.float32),
        grid_spec=pltpu.PrefetchScalarGridSpec(
            num_scalar_prefetch=0,
            grid=(1,),  # whole graph fits in VMEM -> single fused step, no per-step overhead
            in_specs=[
                pl.BlockSpec((n, n), lambda i: (0, 0)),        # adjacency (full)
                pl.BlockSpec((n, f_in), lambda i: (0, 0)),     # features (full)
                pl.BlockSpec((f_in, hid_p), lambda i: (0, 0)),  # W1 (lane-padded)
                pl.BlockSpec((1, hid_p), lambda i: (0, 0)),     # b1
                pl.BlockSpec((hid_p, out_p), lambda i: (0, 0)),  # W2 (lane-padded)
                pl.BlockSpec((1, out_p), lambda i: (0, 0)),     # b2
            ],
            out_specs=pl.BlockSpec((n, out_p), lambda i: (0, 0)),
        ),
        compiler_params=pltpu.CompilerParams(
            dimension_semantics=("arbitrary",),
        ),
    )(adj_m, x_m, w1p, b1p, w2p, b2p)

    return out_padded[:, :out_size]


def _normalized_adjacency(key, n):
    """Random undirected graph + self-loops, symmetric normalization (DGL norm='both')."""
    raw = jax.random.uniform(key, (n, n))
    a = (raw < 0.15).astype(jnp.float32)
    a = jnp.maximum(a, a.T)                            # symmetrize
    a = a.at[jnp.arange(n), jnp.arange(n)].set(1.0)    # self-loops (avoid zero in-degree)
    deg = a.sum(axis=1)
    d_inv_sqrt = 1.0 / jnp.sqrt(deg)
    return (d_inv_sqrt[:, None] * a) * d_inv_sqrt[None, :]


def _glorot(key, shape):
    fan_in, fan_out = shape
    limit = jnp.sqrt(6.0 / (fan_in + fan_out))
    return jax.random.uniform(key, shape, jnp.float32, -limit, limit)


if __name__ == "__main__":
    # Small, deterministic problem: N=64 nodes, in_size=16, hid_size=32, out_size=8.
    N, IN_SIZE, HID_SIZE, OUT_SIZE = 64, 16, 32, 8

    root = jax.random.PRNGKey(0)
    k_adj, k_feat, k_w1, k_w2 = jax.random.split(root, 4)

    adj = _normalized_adjacency(k_adj, N)                            # [N, N] float32
    features = jax.random.normal(k_feat, (N, IN_SIZE), jnp.float32)  # [N, F_in]

    params = {
        "w1": _glorot(k_w1, (IN_SIZE, HID_SIZE)),
        "b1": jnp.zeros((HID_SIZE,), jnp.float32),
        "w2": _glorot(k_w2, (HID_SIZE, OUT_SIZE)),
        "b2": jnp.zeros((OUT_SIZE,), jnp.float32),
    }

    out = gcn_forward(adj, features, params)          # bf16 MXU path
    out = jax.block_until_ready(out)

    # Pure-JAX f32 reference for sanity (relaxed tolerance: kernel uses bf16 MXU inputs).
    h_ref = jnp.maximum(adj @ (features @ params["w1"]) + params["b1"], 0.0)
    ref = adj @ (h_ref @ params["w2"]) + params["b2"]
    assert out.shape == (N, OUT_SIZE)
    assert jnp.allclose(out, ref, atol=5e-2, rtol=5e-2), "mismatch vs reference (bf16 path)"

    # f32 accuracy path (no bf16 cast) should match the reference tightly.
    out_f32 = jax.block_until_ready(gcn_forward(adj, features, params, mxu_dtype=jnp.float32))
    assert jnp.allclose(out_f32, ref, atol=1e-4, rtol=1e-4), "mismatch vs reference (f32 path)"

    print("KERNEL_OK")
</pallas_src>

<mosaic_0001>
module attributes {stable_mosaic.version = 11 : i64} {
  func.func @_gcn_fused_kernel(%arg0: i32, %arg1: memref<64x64xbf16, #tpu.memory_space<vmem>>, %arg2: memref<64x16xbf16, #tpu.memory_space<vmem>>, %arg3: memref<16x128xbf16, #tpu.memory_space<vmem>>, %arg4: memref<1x128xf32, #tpu.memory_space<vmem>>, %arg5: memref<128x128xbf16, #tpu.memory_space<vmem>>, %arg6: memref<1x128xf32, #tpu.memory_space<vmem>>, %arg7: memref<64x128xf32, #tpu.memory_space<vmem>>) attributes {dimension_semantics = [#tpu.dimension_semantics<arbitrary>], iteration_bounds = array<i64: 1>, scalar_prefetch = 0 : i64, scratch_operands = 0 : i64, tpu.core_type = #tpu.core_type<tc>, window_params = [{pipeline_mode = #tpu.pipeline_mode<synchronous>, transform_indices = @transform_0, window_bounds = array<i64: 64, 64>}, {pipeline_mode = #tpu.pipeline_mode<synchronous>, transform_indices = @transform_1, window_bounds = array<i64: 64, 16>}, {pipeline_mode = #tpu.pipeline_mode<synchronous>, transform_indices = @transform_2, window_bounds = array<i64: 16, 128>}, {pipeline_mode = #tpu.pipeline_mode<synchronous>, transform_indices = @transform_3, window_bounds = array<i64: 1, 128>}, {pipeline_mode = #tpu.pipeline_mode<synchronous>, transform_indices = @transform_4, window_bounds = array<i64: 128, 128>}, {pipeline_mode = #tpu.pipeline_mode<synchronous>, transform_indices = @transform_5, window_bounds = array<i64: 1, 128>}, {pipeline_mode = #tpu.pipeline_mode<synchronous>, transform_indices = @transform_6, window_bounds = array<i64: 64, 128>}]} {
    %c0 = arith.constant 0 : index
    %c0_0 = arith.constant 0 : index
    %0 = vector.load %arg1[%c0, %c0_0] : memref<64x64xbf16, #tpu.memory_space<vmem>>, vector<64x64xbf16>
    %c0_1 = arith.constant 0 : index
    %c0_2 = arith.constant 0 : index
    %1 = vector.load %arg2[%c0_1, %c0_2] : memref<64x16xbf16, #tpu.memory_space<vmem>>, vector<64x16xbf16>
    %cst = arith.constant dense<0.000000e+00> : vector<64x16xf32>
    %2 = tpu.matmul %0, %1, %cst {dimension_numbers = #tpu.dot_dimension_numbers<[1], [0], [0], [1], [0, 0, 1, 1], [], []>} : vector<64x64xbf16>, vector<64x16xbf16>, vector<64x16xf32> -> vector<64x16xf32>
    %3 = arith.truncf %2 : vector<64x16xf32> to vector<64x16xbf16>
    %c0_3 = arith.constant 0 : index
    %c0_4 = arith.constant 0 : index
    %4 = vector.load %arg3[%c0_3, %c0_4] : memref<16x128xbf16, #tpu.memory_space<vmem>>, vector<16x128xbf16>
    %cst_5 = arith.constant dense<0.000000e+00> : vector<64x128xf32>
    %5 = tpu.matmul %3, %4, %cst_5 {dimension_numbers = #tpu.dot_dimension_numbers<[1], [0], [0], [1], [0, 0, 1, 1], [], []>} : vector<64x16xbf16>, vector<16x128xbf16>, vector<64x128xf32> -> vector<64x128xf32>
    %c0_6 = arith.constant 0 : index
    %c0_7 = arith.constant 0 : index
    %6 = vector.load %arg4[%c0_6, %c0_7] : memref<1x128xf32, #tpu.memory_space<vmem>>, vector<1x128xf32>
    %7 = vector.broadcast %6 : vector<1x128xf32> to vector<64x128xf32>
    %8 = arith.addf %5, %7 : vector<64x128xf32>
    %cst_8 = arith.constant 0.000000e+00 : f32
    %9 = vector.broadcast %cst_8 : f32 to vector<64x128xf32>
    %10 = arith.maximumf %8, %9 : vector<64x128xf32>
    %11 = arith.truncf %10 : vector<64x128xf32> to vector<64x128xbf16>
    %c0_9 = arith.constant 0 : index
    %c0_10 = arith.constant 0 : index
    %12 = vector.load %arg5[%c0_9, %c0_10] : memref<128x128xbf16, #tpu.memory_space<vmem>>, vector<128x128xbf16>
    %cst_11 = arith.constant dense<0.000000e+00> : vector<64x128xf32>
    %13 = tpu.matmul %11, %12, %cst_11 {dimension_numbers = #tpu.dot_dimension_numbers<[1], [0], [0], [1], [0, 0, 1, 1], [], []>} : vector<64x128xbf16>, vector<128x128xbf16>, vector<64x128xf32> -> vector<64x128xf32>
    %c0_12 = arith.constant 0 : index
    %c0_13 = arith.constant 0 : index
    %14 = vector.load %arg1[%c0_12, %c0_13] : memref<64x64xbf16, #tpu.memory_space<vmem>>, vector<64x64xbf16>
    %15 = arith.truncf %13 : vector<64x128xf32> to vector<64x128xbf16>
    %cst_14 = arith.constant dense<0.000000e+00> : vector<64x128xf32>
    %16 = tpu.matmul %14, %15, %cst_14 {dimension_numbers = #tpu.dot_dimension_numbers<[1], [0], [0], [1], [0, 0, 1, 1], [], []>} : vector<64x64xbf16>, vector<64x128xbf16>, vector<64x128xf32> -> vector<64x128xf32>
    %c0_15 = arith.constant 0 : index
    %c0_16 = arith.constant 0 : index
    %17 = vector.load %arg6[%c0_15, %c0_16] : memref<1x128xf32, #tpu.memory_space<vmem>>, vector<1x128xf32>
    %18 = vector.broadcast %17 : vector<1x128xf32> to vector<64x128xf32>
    %19 = arith.addf %16, %18 : vector<64x128xf32>
    %c0_17 = arith.constant 0 : index
    %c0_18 = arith.constant 0 : index
    %20 = vector.load %arg7[%c0_17, %c0_18] : memref<64x128xf32, #tpu.memory_space<vmem>>, vector<64x128xf32>
    tpu.vector_store %arg7[%c0_17, %c0_18], %19 {strides = array<i32>} : memref<64x128xf32, #tpu.memory_space<vmem>>, vector<64x128xf32>,
    return
  }
  func.func @transform_0(%arg0: i32) -> (i32, i32) {
    %c0_i32 = arith.constant 0 : i32
    %c0_i32_0 = arith.constant 0 : i32
    %c0_i32_1 = arith.constant 0 : i32
    return %c0_i32, %c0_i32_0 : i32, i32
  }
  func.func @transform_1(%arg0: i32) -> (i32, i32) {
    %c0_i32 = arith.constant 0 : i32
    %c0_i32_0 = arith.constant 0 : i32
    %c0_i32_1 = arith.constant 0 : i32
    return %c0_i32, %c0_i32_0 : i32, i32
  }
  func.func @transform_2(%arg0: i32) -> (i32, i32) {
    %c0_i32 = arith.constant 0 : i32
    %c0_i32_0 = arith.constant 0 : i32
    %c0_i32_1 = arith.constant 0 : i32
    return %c0_i32, %c0_i32_0 : i32, i32
  }
  func.func @transform_3(%arg0: i32) -> (i32, i32) {
    %c0_i32 = arith.constant 0 : i32
    %c0_i32_0 = arith.constant 0 : i32
    %c0_i32_1 = arith.constant 0 : i32
    return %c0_i32, %c0_i32_0 : i32, i32
  }
  func.func @transform_4(%arg0: i32) -> (i32, i32) {
    %c0_i32 = arith.constant 0 : i32
    %c0_i32_0 = arith.constant 0 : i32
    %c0_i32_1 = arith.constant 0 : i32
    return %c0_i32, %c0_i32_0 : i32, i32
  }
  func.func @transform_5(%arg0: i32) -> (i32, i32) {
    %c0_i32 = arith.constant 0 : i32
    %c0_i32_0 = arith.constant 0 : i32
    %c0_i32_1 = arith.constant 0 : i32
    return %c0_i32, %c0_i32_0 : i32, i32
  }
  func.func @transform_6(%arg0: i32) -> (i32, i32) {
    %c0_i32 = arith.constant 0 : i32
    %c0_i32_0 = arith.constant 0 : i32
    %c0_i32_1 = arith.constant 0 : i32
    return %c0_i32, %c0_i32_0 : i32, i32
  }
}

</mosaic_0001>

<llo_original>
// kernel: tpu_custom_call.1
$region0: #{tpu_custom_call.1}
  #allocation0 [shape = 'u32[]', space=smem, size = 0x4, offset = 0x4, fixed_abs, tag = 'smem constant byte address 0x4 - core index']
  #allocation1 [shape = 'u32[144,128]{1,0:T(1,128)}', space=vmem, size = 0x12000, scoped, tag = 'internal scratch']
  %s0 = inlined_call_operand.vmem [shape: bf16[64,64], index: 0, kind: input, shape index: {}]
  %s1 = inlined_call_operand.vmem [shape: bf16[64,16], index: 1, kind: input, shape index: {}]
  %s2 = inlined_call_operand.vmem [shape: bf16[16,128], index: 2, kind: input, shape index: {}]
  %s3 = inlined_call_operand.vmem [shape: f32[1,128], index: 3, kind: input, shape index: {}]
  %s4 = inlined_call_operand.hbm [shape: bf16[128,128], index: 4, kind: input, shape index: {}]
  %s5 = inlined_call_operand.vmem [shape: f32[1,128], index: 5, kind: input, shape index: {}]
  %s6 = inlined_call_operand.hbm [shape: f32[64,128], index: 6, kind: output, shape index: {}]
  %s7 = sld [smem:[#allocation0]]
  $region38: #{tpu_custom_call.1} parent=0
    _
  %s9 = ssub.s32 1, %s7
  %s10 = scalar_select 0, %s9, %s7
  $region1: #{tpu_custom_call.1} parent=0
    #allocation2 [shape = 'u8[32768]{0}', space=vmem, size = 0x8000, scoped, tag = 'input window, operand 4, single buffered']
    #allocation3 [shape = 's32[1]{0}', space=sflag, size = 0x4, scoped, tag = 'scoped memory for tpu_custom_call.1']
    #allocation4 [shape = 's32[1]{0}', space=sflag, size = 0x4, scoped, tag = 'scoped memory for tpu_custom_call.1']
    #allocation5 [shape = 'u8[32768]{0}', space=vmem, size = 0x8000, scoped, tag = 'output window, operand 0, single buffered']
    %11 = vsyncpa [#allocation3], 0
    %12 = vsyncpa [#allocation4], 0
    // Predicated region
    $region2: #{tpu_custom_call.1} parent=1 // pred_check
      _
    $region3: #{tpu_custom_call.1} parent=1 // pred_check_branch
      %14 = sbr.rel (0) target = $region5
    $region4: #{tpu_custom_call.1} parent=1 // pred_region
      _
    $region5: #{tpu_custom_call.1} parent=1 // pred_fallthru
      _
    // Predicated region
    $region6: #{tpu_custom_call.1} parent=1 // pred_check
      _
    $region7: #{tpu_custom_call.1} parent=1 // pred_check_branch
      %16 = sbr.rel (0) target = $region9
    $region8: #{tpu_custom_call.1} parent=1 // pred_region
      _
    $region9: #{tpu_custom_call.1} parent=1 // pred_fallthru
      _
    // Predicated region
    $region10: #{tpu_custom_call.1} parent=1 // pred_check
      _
    $region11: #{tpu_custom_call.1} parent=1 // pred_check_branch
      %18 = sbr.rel (0) target = $region13
    $region12: #{tpu_custom_call.1} parent=1 // pred_region
      _
    $region13: #{tpu_custom_call.1} parent=1 // pred_fallthru
      _
    // Predicated region
    $region14: #{tpu_custom_call.1} parent=1 // pred_check
      _
    $region15: #{tpu_custom_call.1} parent=1 // pred_check_branch
      %20 = sbr.rel (0) target = $region17
    $region16: #{tpu_custom_call.1} parent=1 // pred_region
      _
    $region17: #{tpu_custom_call.1} parent=1 // pred_fallthru
      _
    // Predicated region
    $region18: #{tpu_custom_call.1} parent=1 // pred_check
      _
    $region19: #{tpu_custom_call.1} parent=1 // pred_check_branch
      %22 = sbr.rel (0) target = $region21
    $region20: #{tpu_custom_call.1} parent=1 // pred_region
      %s24 = ssub.s32 1024, 1024
      %25 = vsyncadd [#allocation3], %s24
      %s26 = sshll.u32 [#allocation2], 4
      %s27 = int_to_ptr.vmem [resolvable:$true] %s26
      %32 = dma.hbm_to_vmem [thread:$0]  %s4, 1024, %s27, [#allocation3], 64, 64, 4
    $region21: #{tpu_custom_call.1} parent=1 // pred_fallthru
      _
    // Predicated region
    $region22: #{tpu_custom_call.1} parent=1 // pred_check
      _
    $region23: #{tpu_custom_call.1} parent=1 // pred_check_branch
      %34 = sbr.rel (0) target = $region25
    $region24: #{tpu_custom_call.1} parent=1 // pred_region
      _
    $region25: #{tpu_custom_call.1} parent=1 // pred_fallthru
      _
    // Predicated region
    $region26: #{tpu_custom_call.1} parent=1 // pred_check
      _
    $region27: #{tpu_custom_call.1} parent=1 // pred_check_branch
      %36 = sbr.rel (0) target = $region29
    $region28: #{tpu_custom_call.1} parent=1 // pred_region
      %37 = dma.done [#allocation3], 1024
    $region29: #{tpu_custom_call.1} parent=1 // pred_fallthru
      _
    %v39 = vld [vmem:[%s0] sm:$0xf]
    %v40 = vld [vmem:[%s0 + $0x4] sm:$0xf]
    %v41 = vld [vmem:[%s0 + $0x8] sm:$0xf]
    %v42 = vld [vmem:[%s0 + $0xc] sm:$0xf]
    %v43 = vld [vmem:[%s0 + $0x10] sm:$0xf]
    %v44 = vld [vmem:[%s0 + $0x14] sm:$0xf]
    %v45 = vld [vmem:[%s0 + $0x18] sm:$0xf]
    %v46 = vld [vmem:[%s0 + $0x1c] sm:$0xf]
    %v47 = vld [vmem:[%s1] sm:$0xf]
    %v48 = vld [vmem:[%s1 + $0x4] sm:$0xf]
    %v49 = vld [vmem:[%s1 + $0x8] sm:$0xf]
    %v50 = vld [vmem:[%s1 + $0xc] sm:$0xf]
    %v51 = vld [vmem:[%s1 + $0x10] sm:$0xf]
    %v52 = vld [vmem:[%s1 + $0x14] sm:$0xf]
    %v53 = vld [vmem:[%s1 + $0x18] sm:$0xf]
    %v54 = vld [vmem:[%s1 + $0x1c] sm:$0xf]
    %v63 = vunpack.c.l.b16 %v39
    %v64 = vunpack.c.l.b16 %v40
    %v65 = vunpack.c.l.b16 %v41
    %v66 = vunpack.c.l.b16 %v42
    %v67 = vunpack.c.l.b16 %v43
    %v68 = vunpack.c.l.b16 %v44
    %v69 = vunpack.c.l.b16 %v45
    %v70 = vunpack.c.l.b16 %v46
    %v71 = vpack.c.b16 %v64, %v63
    %v72 = vpack.c.b16 %v66, %v65
    %v73 = vpack.c.b16 %v68, %v67
    %v74 = vpack.c.b16 %v70, %v69
    %v83 = vunpack.c.l.b16 %v47
    %v84 = vunpack.c.l.b16 %v48
    %v85 = vunpack.c.l.b16 %v49
    %v86 = vunpack.c.l.b16 %v50
    %v87 = vunpack.c.l.b16 %v51
    %v88 = vunpack.c.l.b16 %v52
    %v89 = vunpack.c.l.b16 %v53
    %v90 = vunpack.c.l.b16 %v54
    %v91 = vpack.c.b16 %v84, %v83
    %v92 = vpack.c.b16 %v86, %v85
    %v93 = vpack.c.b16 %v88, %v87
    %v94 = vpack.c.b16 %v90, %v89
    %vm99 = vcmask 523264
    %v101 = vsel %vm99, %v71, 0
    %v104 = vsel %vm99, %v72, 0
    %v107 = vsel %vm99, %v73, 0
    %v110 = vsel %vm99, %v74, 0
    %112 = vmatprep.subr.bf16.mxu0 0
    %113 = vmatpush1.bf16.msra.mxu0 %v91
    %114 = vmatprep.subr.bf16.mxu0 0
    %115 = vmatpush1.bf16.msra.mxu0 %v92
    %116 = vmatprep.subr.bf16.mxu0 0
    %117 = vmatpush1.bf16.msra.mxu0 %v93
    %118 = vmatprep.subr.bf16.mxu0 0
    %119 = vmatpush1.bf16.msra.mxu0 %v94
    %120 = vmatprep.subr.bf16.mxu0 0
    %121 = vmatpush1.bf16.msra.mxu0 0
    %122 = vmatprep.subr.bf16.mxu0 0
    %123 = vmatpush1.bf16.msra.mxu0 0
    %124 = vmatprep.subr.bf16.mxu0 0
    %125 = vmatpush1.bf16.msra.mxu0 0
    %126 = vmatprep.subr.bf16.mxu0 0
    %127 = vmatpush1.bf16.msra.mxu0 0
    %128 = vmatprep.subr.bf16.mxu0 0
    %129 = vmatpush1.bf16.msra.mxu0 0
    %130 = vmatprep.subr.bf16.mxu0 0
    %131 = vmatpush1.bf16.msra.mxu0 0
    %132 = vmatprep.subr.bf16.mxu0 0
    %133 = vmatpush1.bf16.msra.mxu0 0
    %134 = vmatprep.subr.bf16.mxu0 0
    %135 = vmatpush1.bf16.msra.mxu0 0
    %136 = vmatprep.subr.bf16.mxu0 0
    %137 = vmatpush1.bf16.msra.mxu0 0
    %138 = vmatprep.subr.bf16.mxu0 0
    %139 = vmatpush1.bf16.msra.mxu0 0
    %140 = vmatprep.subr.bf16.mxu0 0
    %141 = vmatpush1.bf16.msra.mxu0 0
    %142 = vmatprep.subr.bf16.mxu0 0
    %143 = vmatpush1.bf16.msra.mxu0 0
    %144 = vmatprep.mubr.bf16.mxu0 0
    %145 = vmatmul.mubr.bf16.gmra.mrb[0].mxu0 %v101
    %v146 = vpop.f32.mrb[0].mxu0
    %v147 = vadd.f32 0.0, %v146
    %v148 = vpop.f32.mrb[0].mxu0
    %v149 = vpop.f32.mrb[0].mxu0
    %v150 = vadd.f32 0.0, %v149
    %v151 = vpop.f32.mrb[0].mxu0
    %152 = vmatprep.mubr.bf16.mxu0 0
    %153 = vmatmul.mubr.bf16.gmra.mrb[0].mxu0 %v104
    %v154 = vpop.f32.mrb[0].mxu0
    %v155 = vadd.f32 0.0, %v154
    %v156 = vpop.f32.mrb[0].mxu0
    %v157 = vpop.f32.mrb[0].mxu0
    %v158 = vadd.f32 0.0, %v157
    %v159 = vpop.f32.mrb[0].mxu0
    %160 = vmatprep.mubr.bf16.mxu0 0
    %161 = vmatmul.mubr.bf16.gmra.mrb[0].mxu0 %v107
    %v162 = vpop.f32.mrb[0].mxu0
    %v163 = vadd.f32 0.0, %v162
    %v164 = vpop.f32.mrb[0].mxu0
    %v165 = vpop.f32.mrb[0].mxu0
    %v166 = vadd.f32 0.0, %v165
    %v167 = vpop.f32.mrb[0].mxu0
    %168 = vmatprep.mubr.bf16.mxu0 0
    %169 = vmatmul.mubr.bf16.gmra.mrb[0].mxu0 %v110
    %v170 = vpop.f32.mrb[0].mxu0
    %v171 = vadd.f32 0.0, %v170
    %v172 = vpop.f32.mrb[0].mxu0
    %v173 = vpop.f32.mrb[0].mxu0
    %v174 = vadd.f32 0.0, %v173
    %v175 = vpop.f32.mrb[0].mxu0
    %176 = vdwg.mxu0
    %v177 = vpack.c.bf16 %v150, %v147
    %v178 = vpack.c.bf16 %v158, %v155
    %v179 = vpack.c.bf16 %v166, %v163
    %v180 = vpack.c.bf16 %v174, %v171
    %v181 = vld [vmem:[%s2] sm:$0xf]
    %v182 = vld [vmem:[%s2 + $0x4] sm:$0xf]
    %v183 = vld [vmem:[%s3] sm:$0x1]
    %v185 = vlaneseq
    %v186 = vshrl.u32 %v185, 7
    %v187 = vsub.s32 0, %v186
    %v188 = vrot.slane %v183, %v187
    %v192 = vunpack.c.l.b16 %v181
    %v193 = vunpack.c.l.b16 %v182
    %v194 = vpack.c.b16 %v193, %v192
    %vm196 = vcmask 130048
    %v198 = vsel %vm196, %v177, 0
    %v201 = vsel %vm196, %v178, 0
    %v204 = vsel %vm196, %v179, 0
    %v207 = vsel %vm196, %v180, 0
    %209 = vmatprep.subr.bf16.mxu0 0
    %210 = vmatpush1.bf16.msra.mxu0 %v194
    %211 = vmatprep.subr.bf16.mxu0 0
    %212 = vmatpush1.bf16.msra.mxu0 0
    %213 = vmatprep.subr.bf16.mxu0 0
    %214 = vmatpush1.bf16.msra.mxu0 0
    %215 = vmatprep.subr.bf16.mxu0 0
    %216 = vmatpush1.bf16.msra.mxu0 0
    %217 = vmatprep.subr.bf16.mxu0 0
    %218 = vmatpush1.bf16.msra.mxu0 0
    %219 = vmatprep.subr.bf16.mxu0 0
    %220 = vmatpush1.bf16.msra.mxu0 0
    %221 = vmatprep.subr.bf16.mxu0 0
    %222 = vmatpush1.bf16.msra.mxu0 0
    %223 = vmatprep.subr.bf16.mxu0 0
    %224 = vmatpush1.bf16.msra.mxu0 0
    %225 = vmatprep.subr.bf16.mxu0 0
    %226 = vmatpush1.bf16.msra.mxu0 0
    %227 = vmatprep.subr.bf16.mxu0 0
    %228 = vmatpush1.bf16.msra.mxu0 0
    %229 = vmatprep.subr.bf16.mxu0 0
    %230 = vmatpush1.bf16.msra.mxu0 0
    %231 = vmatprep.subr.bf16.mxu0 0
    %232 = vmatpush1.bf16.msra.mxu0 0
    %233 = vmatprep.subr.bf16.mxu0 0
    %234 = vmatpush1.bf16.msra.mxu0 0
    %235 = vmatprep.subr.bf16.mxu0 0
    %236 = vmatpush1.bf16.msra.mxu0 0
    %237 = vmatprep.subr.bf16.mxu0 0
    %238 = vmatpush1.bf16.msra.mxu0 0
    %239 = vmatprep.subr.bf16.mxu0 0
    %240 = vmatpush1.bf16.msra.mxu0 0
    %241 = vmatprep.mubr.bf16.mxu0 0
    %242 = vmatmul.mubr.bf16.gmra.mrb[0].mxu0 %v198
    %v243 = vpop.f32.mrb[0].mxu0
    %v244 = vadd.f32 %v188, %v243
    %v245 = vpop.f32.mrb[0].mxu0
    %v246 = vpop.f32.mrb[0].mxu0
    %v247 = vadd.f32 %v188, %v246
    %v248 = vpop.f32.mrb[0].mxu0
    %249 = vmatprep.mubr.bf16.mxu0 0
    %250 = vmatmul.mubr.bf16.gmra.mrb[0].mxu0 %v201
    %v251 = vpop.f32.mrb[0].mxu0
    %v252 = vadd.f32 %v188, %v251
    %v253 = vpop.f32.mrb[0].mxu0
    %v254 = vpop.f32.mrb[0].mxu0
    %v255 = vadd.f32 %v188, %v254
    %v256 = vpop.f32.mrb[0].mxu0
    %257 = vmatprep.mubr.bf16.mxu0 0
    %258 = vmatmul.mubr.bf16.gmra.mrb[0].mxu0 %v204
    %v259 = vpop.f32.mrb[0].mxu0
    %v260 = vadd.f32 %v188, %v259
    %v261 = vpop.f32.mrb[0].mxu0
    %v262 = vpop.f32.mrb[0].mxu0
    %v263 = vadd.f32 %v188, %v262
    %v264 = vpop.f32.mrb[0].mxu0
    %265 = vmatprep.mubr.bf16.mxu0 0
    %266 = vmatmul.mubr.bf16.gmra.mrb[0].mxu0 %v207
    %v267 = vpop.f32.mrb[0].mxu0
    %v268 = vadd.f32 %v188, %v267
    %v269 = vpop.f32.mrb[0].mxu0
    %v270 = vpop.f32.mrb[0].mxu0
    %v271 = vadd.f32 %v188, %v270
    %v272 = vpop.f32.mrb[0].mxu0
    %273 = vdwg.mxu0
    %v274 = vmax.f32 %v244, 0.0
    %v275 = vmax.f32 %v247, 0.0
    %v276 = vmax.f32 %v252, 0.0
    %v277 = vmax.f32 %v255, 0.0
    %v278 = vmax.f32 %v260, 0.0
    %v279 = vmax.f32 %v263, 0.0
    %v280 = vmax.f32 %v268, 0.0
    %v281 = vmax.f32 %v271, 0.0
    %v282 = vpack.c.bf16 %v275, %v274
    %v283 = vpack.c.bf16 %v277, %v276
    %v284 = vpack.c.bf16 %v279, %v278
    %v285 = vpack.c.bf16 %v281, %v280
    %v286 = vld [vmem:[#allocation2] sm:$0xf]
    %v287 = vld [vmem:[#allocation2 + $0x4] sm:$0xf]
    %v288 = vld [vmem:[#allocation2 + $0x8] sm:$0xf]
    %v289 = vld [vmem:[#allocation2 + $0xc] sm:$0xf]
    %v290 = vld [vmem:[#allocation2 + $0x10] sm:$0xf]
    %v291 = vld [vmem:[#allocation2 + $0x14] sm:$0xf]
    %v292 = vld [vmem:[#allocation2 + $0x18] sm:$0xf]
    %v293 = vld [vmem:[#allocation2 + $0x1c] sm:$0xf]
    %v294 = vld [vmem:[#allocation2 + $0x20] sm:$0xf]
    %v295 = vld [vmem:[#allocation2 + $0x24] sm:$0xf]
    %v296 = vld [vmem:[#allocation2 + $0x28] sm:$0xf]
    %v297 = vld [vmem:[#allocation2 + $0x2c] sm:$0xf]
    %v298 = vld [vmem:[#allocation2 + $0x30] sm:$0xf]
    %v299 = vld [vmem:[#allocation2 + $0x34] sm:$0xf]
    %v300 = vld [vmem:[#allocation2 + $0x38] sm:$0xf]
    %v301 = vld [vmem:[#allocation2 + $0x3c] sm:$0xf]
    %v318 = vunpack.c.l.b16 %v286
    %v319 = vunpack.c.l.b16 %v287
    %v320 = vunpack.c.l.b16 %v288
    %v321 = vunpack.c.l.b16 %v289
    %v322 = vunpack.c.l.b16 %v290
    %v323 = vunpack.c.l.b16 %v291
    %v324 = vunpack.c.l.b16 %v292
    %v325 = vunpack.c.l.b16 %v293
    %v326 = vunpack.c.l.b16 %v294
    %v327 = vunpack.c.l.b16 %v295
    %v328 = vunpack.c.l.b16 %v296
    %v329 = vunpack.c.l.b16 %v297
    %v330 = vunpack.c.l.b16 %v298
    %v331 = vunpack.c.l.b16 %v299
    %v332 = vunpack.c.l.b16 %v300
    %v333 = vunpack.c.l.b16 %v301
    %v334 = vpack.c.b16 %v319, %v318
    %v335 = vpack.c.b16 %v321, %v320
    %v336 = vpack.c.b16 %v323, %v322
    %v337 = vpack.c.b16 %v325, %v324
    %v338 = vpack.c.b16 %v327, %v326
    %v339 = vpack.c.b16 %v329, %v328
    %v340 = vpack.c.b16 %v331, %v330
    %v341 = vpack.c.b16 %v333, %v332
    %350 = vmatprep.subr.bf16.mxu0 0
    %351 = vmatpush1.bf16.msra.mxu0 %v334
    %352 = vmatprep.subr.bf16.mxu0 0
    %353 = vmatpush1.bf16.msra.mxu0 %v335
    %354 = vmatprep.subr.bf16.mxu0 0
    %355 = vmatpush1.bf16.msra.mxu0 %v336
    %356 = vmatprep.subr.bf16.mxu0 0
    %357 = vmatpush1.bf16.msra.mxu0 %v337
    %358 = vmatprep.subr.bf16.mxu0 0
    %359 = vmatpush1.bf16.msra.mxu0 %v338
    %360 = vmatprep.subr.bf16.mxu0 0
    %361 = vmatpush1.bf16.msra.mxu0 %v339
    %362 = vmatprep.subr.bf16.mxu0 0
    %363 = vmatpush1.bf16.msra.mxu0 %v340
    %364 = vmatprep.subr.bf16.mxu0 0
    %365 = vmatpush1.bf16.msra.mxu0 %v341
    %366 = vmatprep.subr.bf16.mxu0 0
    %367 = vmatpush1.bf16.msra.mxu0 0
    %368 = vmatprep.subr.bf16.mxu0 0
    %369 = vmatpush1.bf16.msra.mxu0 0
    %370 = vmatprep.subr.bf16.mxu0 0
    %371 = vmatpush1.bf16.msra.mxu0 0
    %372 = vmatprep.subr.bf16.mxu0 0
    %373 = vmatpush1.bf16.msra.mxu0 0
    %374 = vmatprep.subr.bf16.mxu0 0
    %375 = vmatpush1.bf16.msra.mxu0 0
    %376 = vmatprep.subr.bf16.mxu0 0
    %377 = vmatpush1.bf16.msra.mxu0 0
    %378 = vmatprep.subr.bf16.mxu0 0
    %379 = vmatpush1.bf16.msra.mxu0 0
    %380 = vmatprep.subr.bf16.mxu0 0
    %381 = vmatpush1.bf16.msra.mxu0 0
    %382 = vmatprep.mubr.bf16.mxu0 0
    %383 = vmatmul.mubr.bf16.gmra.mrb[0].mxu0 %v282
    %v384 = vpop.f32.mrb[0].mxu0
    %v385 = vadd.f32 0.0, %v384
    %v386 = vpop.f32.mrb[0].mxu0
    %v387 = vpop.f32.mrb[0].mxu0
    %v388 = vadd.f32 0.0, %v387
    %v389 = vpop.f32.mrb[0].mxu0
    %390 = vmatprep.mubr.bf16.mxu0 0
    %391 = vmatmul.mubr.bf16.gmra.mrb[0].mxu0 %v283
    %v392 = vpop.f32.mrb[0].mxu0
    %v393 = vadd.f32 0.0, %v392
    %v394 = vpop.f32.mrb[0].mxu0
    %v395 = vpop.f32.mrb[0].mxu0
    %v396 = vadd.f32 0.0, %v395
    %v397 = vpop.f32.mrb[0].mxu0
    %398 = vmatprep.mubr.bf16.mxu0 0
    %399 = vmatmul.mubr.bf16.gmra.mrb[0].mxu0 %v284
    %v400 = vpop.f32.mrb[0].mxu0
    %v401 = vadd.f32 0.0, %v400
    %v402 = vpop.f32.mrb[0].mxu0
    %v403 = vpop.f32.mrb[0].mxu0
    %v404 = vadd.f32 0.0, %v403
    %v405 = vpop.f32.mrb[0].mxu0
    %406 = vmatprep.mubr.bf16.mxu0 0
    %407 = vmatmul.mubr.bf16.gmra.mrb[0].mxu0 %v285
    %v408 = vpop.f32.mrb[0].mxu0
    %v409 = vadd.f32 0.0, %v408
    %v410 = vpop.f32.mrb[0].mxu0
    %v411 = vpop.f32.mrb[0].mxu0
    %v412 = vadd.f32 0.0, %v411
    %v413 = vpop.f32.mrb[0].mxu0
    %414 = vdwg.mxu0
    %v415 = vpack.c.bf16 %v388, %v385
    %v416 = vpack.c.bf16 %v396, %v393
    %v417 = vpack.c.bf16 %v404, %v401
    %v418 = vpack.c.bf16 %v412, %v409
    %v419 = vld [vmem:[%s5] sm:$0x1]
    %v421 = vlaneseq
    %v422 = vshrl.u32 %v421, 7
    %v423 = vsub.s32 0, %v422
    %v424 = vrot.slane %v419, %v423
    %426 = vmatprep.subr.bf16.mxu0 0
    %427 = vmatpush1.bf16.msra.mxu0 %v415
    %428 = vmatprep.subr.bf16.mxu0 0
    %429 = vmatpush1.bf16.msra.mxu0 %v416
    %430 = vmatprep.subr.bf16.mxu0 0
    %431 = vmatpush1.bf16.msra.mxu0 %v417
    %432 = vmatprep.subr.bf16.mxu0 0
    %433 = vmatpush1.bf16.msra.mxu0 %v418
    %434 = vmatprep.subr.bf16.mxu0 0
    %435 = vmatpush1.bf16.msra.mxu0 0
    %436 = vmatprep.subr.bf16.mxu0 0
    %437 = vmatpush1.bf16.msra.mxu0 0
    %438 = vmatprep.subr.bf16.mxu0 0
    %439 = vmatpush1.bf16.msra.mxu0 0
    %440 = vmatprep.subr.bf16.mxu0 0
    %441 = vmatpush1.bf16.msra.mxu0 0
    %442 = vmatprep.subr.bf16.mxu0 0
    %443 = vmatpush1.bf16.msra.mxu0 0
    %444 = vmatprep.subr.bf16.mxu0 0
    %445 = vmatpush1.bf16.msra.mxu0 0
    %446 = vmatprep.subr.bf16.mxu0 0
    %447 = vmatpush1.bf16.msra.mxu0 0
    %448 = vmatprep.subr.bf16.mxu0 0
    %449 = vmatpush1.bf16.msra.mxu0 0
    %450 = vmatprep.subr.bf16.mxu0 0
    %451 = vmatpush1.bf16.msra.mxu0 0
    %452 = vmatprep.subr.bf16.mxu0 0
    %453 = vmatpush1.bf16.msra.mxu0 0
    %454 = vmatprep.subr.bf16.mxu0 0
    %455 = vmatpush1.bf16.msra.mxu0 0
    %456 = vmatprep.subr.bf16.mxu0 0
    %457 = vmatpush1.bf16.msra.mxu0 0
    %458 = vmatprep.mubr.bf16.mxu0 0
    %459 = vmatmul.mubr.bf16.gmra.mrb[0].mxu0 %v101
    %v460 = vpop.f32.mrb[0].mxu0
    %v461 = vadd.f32 %v424, %v460
    %v462 = vpop.f32.mrb[0].mxu0
    %v463 = vpop.f32.mrb[0].mxu0
    %v464 = vadd.f32 %v424, %v463
    %v465 = vpop.f32.mrb[0].mxu0
    %466 = vmatprep.mubr.bf16.mxu0 0
    %467 = vmatmul.mubr.bf16.gmra.mrb[0].mxu0 %v104
    %v468 = vpop.f32.mrb[0].mxu0
    %v469 = vadd.f32 %v424, %v468
    %v470 = vpop.f32.mrb[0].mxu0
    %v471 = vpop.f32.mrb[0].mxu0
    %v472 = vadd.f32 %v424, %v471
    %v473 = vpop.f32.mrb[0].mxu0
    %474 = vmatprep.mubr.bf16.mxu0 0
    %475 = vmatmul.mubr.bf16.gmra.mrb[0].mxu0 %v107
    %v476 = vpop.f32.mrb[0].mxu0
    %v477 = vadd.f32 %v424, %v476
    %v478 = vpop.f32.mrb[0].mxu0
    %v479 = vpop.f32.mrb[0].mxu0
    %v480 = vadd.f32 %v424, %v479
    %v481 = vpop.f32.mrb[0].mxu0
    %482 = vmatprep.mubr.bf16.mxu0 0
    %483 = vmatmul.mubr.bf16.gmra.mrb[0].mxu0 %v110
    %v484 = vpop.f32.mrb[0].mxu0
    %v485 = vadd.f32 %v424, %v484
    %v486 = vpop.f32.mrb[0].mxu0
    %v487 = vpop.f32.mrb[0].mxu0
    %v488 = vadd.f32 %v424, %v487
    %v489 = vpop.f32.mrb[0].mxu0
    %490 = vdwg.mxu0
    %491 = vst [vmem:[#allocation5] sm:$0xff] %v461
    %492 = vst [vmem:[#allocation5 + $0x8] sm:$0xff] %v464
    %493 = vst [vmem:[#allocation5 + $0x10] sm:$0xff] %v469
    %494 = vst [vmem:[#allocation5 + $0x18] sm:$0xff] %v472
    %495 = vst [vmem:[#allocation5 + $0x20] sm:$0xff] %v477
    %496 = vst [vmem:[#allocation5 + $0x28] sm:$0xff] %v480
    %497 = vst [vmem:[#allocation5 + $0x30] sm:$0xff] %v485
    %498 = vst [vmem:[#allocation5 + $0x38] sm:$0xff] %v488
    // Predicated region
    $region30: #{tpu_custom_call.1} parent=1 // pred_check
      _
    $region31: #{tpu_custom_call.1} parent=1 // pred_check_branch
      %500 = sbr.rel (0) target = $region33
    $region32: #{tpu_custom_call.1} parent=1 // pred_region
      %s502 = ssub.s32 1024, 1024
      %503 = vsyncadd [#allocation4], %s502
      %s504 = sshll.u32 [#allocation5], 4
      %s505 = int_to_ptr.vmem [resolvable:$true] %s504
      %510 = dma.vmem_to_hbm [thread:$0]  %s505, 1024, %s6, [#allocation4], 128, 128, 8
    $region33: #{tpu_custom_call.1} parent=1 // pred_fallthru
      _
    // Predicated region
    $region34: #{tpu_custom_call.1} parent=1 // pred_check
      _
    $region35: #{tpu_custom_call.1} parent=1 // pred_check_branch
      %512 = sbr.rel (0) target = $region37
    $region36: #{tpu_custom_call.1} parent=1 // pred_region
      %513 = dma.done [#allocation4], 1024
    $region37: #{tpu_custom_call.1} parent=1 // pred_fallthru
      _
    %514 = vsyncpa [#allocation3], 1
    %515 = vsyncpa [#allocation4], 1

</llo_original>
